<compile_context>
chip_gen: v5e
topology: v5e:2x2
jax: 0.10.0
libtpu: 0.0.40
codegen_flags: <defaults>
</compile_context>

<pallas_src>
import functools

import jax
import jax.numpy as jnp
from jax import lax
from jax.experimental import pallas as pl
from jax.experimental.pallas import tpu as pltpu

LANE = 128
# Raw XW bytes allowed for VMEM residency in kernel 2 (pipeline double-buffers,
# so real cost is 2x; sized against v7x's 64 MiB VMEM per TensorCore).
XW_RESIDENT_BYTES_CAP = 8 * 1024 * 1024
# bf16 elements per A_hat tile buffer: 4M elems = 8 MiB/buffer (16 MiB 2-buf).
A_TILE_ELEMS_CAP = 4 * 1024 * 1024


def _round_up(x, m):
    return (x + m - 1) // m * m


def _pick_tile(n, candidates):
    for c in candidates:
        if n % c == 0:
            return c
    return n


def _pad_nodes(n):
    # Pad N so the large tile candidates divide it (zero rows/cols of A_hat
    # are exact no-ops for the result).
    if n <= 128:
        return 128
    if n <= 1024:
        return _round_up(n, 256)
    return _round_up(n, 1024)


def _pick_tm(n_pad):
    # Largest row tile such that the "parallel" row axis still has >= 2 blocks
    # (so v7x's two TensorCores both get work); fall back to the largest
    # divisor otherwise.
    for c in (1024, 512, 256, 128):
        if n_pad % c == 0 and n_pad // c >= 2:
            return c
    return _pick_tile(n_pad, (1024, 512, 256, 128))


def _pick_tk(n_pad, tm):
    for c in (2048, 1024, 512, 256, 128):
        if n_pad % c == 0 and tm * c <= A_TILE_ELEMS_CAP:
            return c
    return _pick_tile(n_pad, (2048, 1024, 512, 256, 128))


# ---------------------------------------------------------------------------
# Kernel 1: per-node projections (hoisted out of the A_hat reduction)
#   prod = X @ [W_gcn | W_res]   (single MXU matmul, X read once)
#   XW   = prod[:, :Fp]  -> bf16 (streamed / resident in kernel 2)
#   RES  = prod[:, Fp:] + (b_gcn + b_res)   -> f32
# ---------------------------------------------------------------------------
def proj_kernel(x_ref, wcat_ref, b_ref, xw_ref, res_ref, *, f_pad):
    prod = jnp.dot(x_ref[...], wcat_ref[...],
                   preferred_element_type=jnp.float32)          # [TM, 2*Fp]
    xw_ref[...] = prod[:, :f_pad].astype(xw_ref.dtype)
    res_ref[...] = prod[:, f_pad:] + b_ref[...]


# ---------------------------------------------------------------------------
# Kernel 2: tiled aggregation + fused LayerNorm + ReLU
#   o_ref (f32, VMEM-resident over k) accumulates A_hat[i,k] @ XW[k]
#   last k:  h = o + RES[i];  o = ReLU(LayerNorm(h)) over the real f_out cols
# ---------------------------------------------------------------------------
def agg_kernel(a_ref, xw_ref, res_ref, gamma_ref, beta_ref, o_ref,
               *, f_out, tk, xw_resident):
    k = pl.program_id(1)

    @pl.when(k == 0)
    def _():
        o_ref[...] = jnp.zeros_like(o_ref)

    if xw_resident:
        # Full XW sits in VMEM (constant index_map); slice the k-th row band.
        start = pl.multiple_of(k * tk, tk)
        xw = xw_ref[pl.ds(start, tk), :]
    else:
        xw = xw_ref[...]

    o_ref[...] += jnp.dot(a_ref[...], xw, preferred_element_type=jnp.float32)

    @pl.when(k == pl.num_programs(1) - 1)
    def _():
        h = o_ref[...] + res_ref[...]                             # f32
        tm, f_pad = h.shape
        col = lax.broadcasted_iota(jnp.int32, (tm, f_pad), 1)
        mask = (col < f_out).astype(jnp.float32)
        h = h * mask                                              # zero pad cols
        inv_f = 1.0 / f_out
        mean = jnp.sum(h, axis=-1, keepdims=True) * inv_f
        diff = (h - mean) * mask
        var = jnp.sum(diff * diff, axis=-1, keepdims=True) * inv_f
        h_norm = diff * lax.rsqrt(var + 1e-5)
        out = h_norm * gamma_ref[...] + beta_ref[...]
        o_ref[...] = jnp.maximum(out, 0.0)
        # TODO(synk): Dropout is eval-mode identity (p=0.0 default); training
        # mode would need pltpu.prng_seed / prng_random_bits masking here.


# ---------------------------------------------------------------------------
# Wrapper: padding, packing, the two pallas_calls.
#   a_hat_pad : (n_pad, n_pad) normalized adjacency, already padded, any dtype
#               (built as bf16 by build_normalized_adjacency below).
#   x         : (n, f_in) node features (unpadded).
# ---------------------------------------------------------------------------
def graph_conv_layer(a_hat_pad, x, w_gcn, b_gcn, w_res, b_res, gamma, beta,
                     *, tile_m=None, tile_k=None, xw_resident=None):
    n, f_in = x.shape
    f_out = w_gcn.shape[1]
    n_pad = a_hat_pad.shape[0]
    assert a_hat_pad.shape == (n_pad, n_pad)
    assert n_pad >= n and n_pad % LANE == 0

    f_in_pad = _round_up(f_in, 8)        # sublane-aligned contraction dim only
    f_pad = _round_up(f_out, LANE)       # lane-dense feature dim

    # ---- pack the small O(N*F) / O(F) operands (cheap XLA pads) ------------
    x_p = jnp.zeros((n_pad, f_in_pad), jnp.float32).at[:n, :f_in].set(x)
    w_cat = jnp.zeros((f_in_pad, 2 * f_pad), jnp.float32)
    w_cat = w_cat.at[:f_in, :f_out].set(w_gcn)
    w_cat = w_cat.at[:f_in, f_pad:f_pad + f_out].set(w_res)
    b_tot = jnp.zeros((1, f_pad), jnp.float32).at[0, :f_out].set(
        (b_gcn + b_res).reshape(-1))
    gamma_p = jnp.zeros((1, f_pad), jnp.float32).at[0, :f_out].set(
        gamma.reshape(-1))
    beta_p = jnp.zeros((1, f_pad), jnp.float32).at[0, :f_out].set(
        beta.reshape(-1))

    a_bf = a_hat_pad.astype(jnp.bfloat16)   # no-op when already bf16

    # ---- kernel 1: projections (XW, RES), once per node --------------------
    tm_p = _pick_tile(n_pad, (512, 256, 128))
    xw_bf, res_f32 = pl.pallas_call(
        functools.partial(proj_kernel, f_pad=f_pad),
        out_shape=(jax.ShapeDtypeStruct((n_pad, f_pad), jnp.bfloat16),
                   jax.ShapeDtypeStruct((n_pad, f_pad), jnp.float32)),
        grid_spec=pltpu.PrefetchScalarGridSpec(
            num_scalar_prefetch=0,
            grid=(n_pad // tm_p,),
            in_specs=[
                pl.BlockSpec((tm_p, f_in_pad), lambda i: (i, 0)),
                pl.BlockSpec((f_in_pad, 2 * f_pad), lambda i: (0, 0)),
                pl.BlockSpec((1, f_pad), lambda i: (0, 0)),
            ],
            out_specs=[
                pl.BlockSpec((tm_p, f_pad), lambda i: (i, 0)),
                pl.BlockSpec((tm_p, f_pad), lambda i: (i, 0)),
            ]),
        compiler_params=pltpu.CompilerParams(
            dimension_semantics=("parallel",),
            vmem_limit_bytes=32 * 1024 * 1024),
    )(x_p, w_cat, b_tot)

    # ---- kernel 2: tiled A_hat @ XW + residual + LayerNorm + ReLU ----------
    tm = tile_m if tile_m is not None else _pick_tm(n_pad)
    tk = tile_k if tile_k is not None else _pick_tk(n_pad, tm)
    assert n_pad % tm == 0 and n_pad % tk == 0
    if xw_resident is None:
        xw_resident = n_pad * f_pad * 2 <= XW_RESIDENT_BYTES_CAP

    if xw_resident:
        # Whole XW held in VMEM (constant index_map -> fetched once).
        xw_spec = pl.BlockSpec((n_pad, f_pad), lambda i, k: (0, 0))
    else:
        xw_spec = pl.BlockSpec((tk, f_pad), lambda i, k: (k, 0))

    out_pad = pl.pallas_call(
        functools.partial(agg_kernel, f_out=f_out, tk=tk,
                          xw_resident=xw_resident),
        out_shape=jax.ShapeDtypeStruct((n_pad, f_pad), jnp.float32),
        grid_spec=pltpu.PrefetchScalarGridSpec(
            num_scalar_prefetch=0,
            grid=(n_pad // tm, n_pad // tk),
            in_specs=[
                pl.BlockSpec((tm, tk), lambda i, k: (i, k)),      # A_hat bf16
                xw_spec,                                          # XW bf16
                pl.BlockSpec((tm, f_pad), lambda i, k: (i, 0)),   # RES f32
                pl.BlockSpec((1, f_pad), lambda i, k: (0, 0)),    # gamma
                pl.BlockSpec((1, f_pad), lambda i, k: (0, 0)),    # beta
            ],
            out_specs=pl.BlockSpec((tm, f_pad), lambda i, k: (i, 0))),
        compiler_params=pltpu.CompilerParams(
            dimension_semantics=("parallel", "arbitrary"),
            vmem_limit_bytes=48 * 1024 * 1024),
    )(a_bf, xw_bf, res_f32, gamma_p, beta_p)

    return out_pad[:n, :f_out]


# ---------------------------------------------------------------------------
# Glue: dense normalized adjacency, built directly at padded size and in the
# streaming dtype (no extra XLA pad/astype N^2 passes). torch_geometric
# GCNConv defaults: add self-loops, symmetric D^-1/2 (A+I) D^-1/2.
# Assumes edge_index carries no pre-existing self-loops.
# ---------------------------------------------------------------------------
def build_normalized_adjacency(edge_index, num_nodes, num_nodes_padded,
                               dtype=jnp.bfloat16):
    src = edge_index[0]
    dst = edge_index[1]
    adj = jnp.zeros((num_nodes_padded, num_nodes_padded), dtype=jnp.float32)
    adj = adj.at[dst, src].add(1.0)
    diag = jnp.arange(num_nodes)
    adj = adj.at[diag, diag].add(1.0)           # self-loops on real nodes only
    deg = jnp.sum(adj, axis=1)                  # padded rows have deg 0
    d_inv_sqrt = jnp.where(deg > 0, lax.rsqrt(deg), 0.0)
    a_hat = d_inv_sqrt[:, None] * adj * d_inv_sqrt[None, :]
    return a_hat.astype(dtype)


if __name__ == "__main__":
    # Small but grid-exercising setup: 300 nodes -> padded to 512.
    num_nodes = 300
    in_features = 8
    out_features = 32

    key = jax.random.PRNGKey(0)
    k_x, k_wg, k_wr, k_br = jax.random.split(key, 4)

    x = jax.random.normal(k_x, (num_nodes, in_features), dtype=jnp.float32)

    # Ring graph (both directions), no self-loops in edge_index
    idx = jnp.arange(num_nodes, dtype=jnp.int32)
    nxt = (idx + 1) % num_nodes
    edge_index = jnp.stack(
        [jnp.concatenate([idx, nxt]), jnp.concatenate([nxt, idx])], axis=0)

    # Parameters (deterministic init)
    w_gcn = jax.random.normal(k_wg, (in_features, out_features), jnp.float32) * 0.1
    b_gcn = jnp.zeros((out_features,), jnp.float32)                      # GCNConv bias
    w_res = jax.random.normal(k_wr, (in_features, out_features), jnp.float32) * 0.1
    b_res = jax.random.normal(k_br, (out_features,), jnp.float32) * 0.1  # Linear bias
    gamma = jnp.ones((out_features,), jnp.float32)                       # LN weight
    beta = jnp.zeros((out_features,), jnp.float32)                       # LN bias

    n_pad = _pad_nodes(num_nodes)
    a_hat = build_normalized_adjacency(edge_index, num_nodes, n_pad)     # bf16, padded

    # Run 1: default (big tiles, XW resident in VMEM)
    out = graph_conv_layer(a_hat, x, w_gcn, b_gcn, w_res, b_res, gamma, beta)
    out = jax.block_until_ready(out)
    assert out.shape == (num_nodes, out_features)

    # Run 2: forced small tiles + streamed XW -> exercises the multi-step
    # k accumulation (pl.when init/finalize) and the streaming BlockSpec path.
    out_small = graph_conv_layer(a_hat, x, w_gcn, b_gcn, w_res, b_res,
                                 gamma, beta, tile_m=128, tile_k=128,
                                 xw_resident=False)
    out_small = jax.block_until_ready(out_small)

    def ln_relu(h):
        mu = jnp.mean(h, axis=-1, keepdims=True)
        var = jnp.mean((h - mu) ** 2, axis=-1, keepdims=True)
        return jnp.maximum((h - mu) * lax.rsqrt(var + 1e-5) * gamma + beta, 0.0)

    # Reference mirroring the kernel dtype path (bf16 A_hat / XW, f32 accum)
    hi = lax.Precision.HIGHEST
    xw = jnp.dot(x, w_gcn, precision=hi)
    res = jnp.dot(x, w_res, precision=hi) + b_gcn + b_res
    xw_bf = xw.astype(jnp.bfloat16).astype(jnp.float32)
    a_f32 = a_hat[:num_nodes, :num_nodes].astype(jnp.float32)
    ref_bf = ln_relu(jnp.dot(a_f32, xw_bf, precision=hi) + res)
    for o in (out, out_small):
        assert jnp.allclose(o, ref_bf, atol=5e-3, rtol=5e-3), \
            float(jnp.max(jnp.abs(o - ref_bf)))

    # Full-f32 module reference (loose: accounts for bf16 streaming of A_hat/XW)
    a_full = build_normalized_adjacency(edge_index, num_nodes, num_nodes,
                                        dtype=jnp.float32)
    ref_f32 = ln_relu(jnp.dot(a_full, xw, precision=hi) + res)
    assert jnp.allclose(out, ref_f32, atol=5e-2, rtol=5e-2), \
        float(jnp.max(jnp.abs(out - ref_f32)))

    print("KERNEL_OK")
</pallas_src>

<mosaic_0001>
module attributes {stable_mosaic.version = 11 : i64} {
  func.func @proj_kernel(%arg0: i32, %arg1: memref<512x8xf32, #tpu.memory_space<vmem>>, %arg2: memref<8x256xf32, #tpu.memory_space<vmem>>, %arg3: memref<1x128xf32, #tpu.memory_space<vmem>>, %arg4: memref<512x128xbf16, #tpu.memory_space<vmem>>, %arg5: memref<512x128xf32, #tpu.memory_space<vmem>>) attributes {dimension_semantics = [#tpu.dimension_semantics<parallel>], iteration_bounds = array<i64: 1>, scalar_prefetch = 0 : i64, scratch_operands = 0 : i64, tpu.core_type = #tpu.core_type<tc>, window_params = [{transform_indices = @transform_0, window_bounds = array<i64: 512, 8>}, {pipeline_mode = #tpu.pipeline_mode<synchronous>, transform_indices = @transform_1, window_bounds = array<i64: 8, 256>}, {pipeline_mode = #tpu.pipeline_mode<synchronous>, transform_indices = @transform_2, window_bounds = array<i64: 1, 128>}, {transform_indices = @transform_3, window_bounds = array<i64: 512, 128>}, {transform_indices = @transform_4, window_bounds = array<i64: 512, 128>}]} {
    %c0 = arith.constant 0 : index
    %c0_0 = arith.constant 0 : index
    %0 = vector.load %arg1[%c0, %c0_0] : memref<512x8xf32, #tpu.memory_space<vmem>>, vector<512x8xf32>
    %c0_1 = arith.constant 0 : index
    %c0_2 = arith.constant 0 : index
    %1 = vector.load %arg2[%c0_1, %c0_2] : memref<8x256xf32, #tpu.memory_space<vmem>>, vector<8x256xf32>
    %cst = arith.constant dense<0.000000e+00> : vector<512x256xf32>
    %2 = tpu.matmul %0, %1, %cst {dimension_numbers = #tpu.dot_dimension_numbers<[1], [0], [0], [1], [0, 0, 1, 1], [], []>} : vector<512x8xf32>, vector<8x256xf32>, vector<512x256xf32> -> vector<512x256xf32>
    %3 = vector.extract_strided_slice %2 {offsets = [0, 0], sizes = [512, 128], strides = [1, 1]} : vector<512x256xf32> to vector<512x128xf32>
    %4 = arith.truncf %3 : vector<512x128xf32> to vector<512x128xbf16>
    %c0_3 = arith.constant 0 : index
    %c0_4 = arith.constant 0 : index
    %5 = vector.load %arg4[%c0_3, %c0_4] : memref<512x128xbf16, #tpu.memory_space<vmem>>, vector<512x128xbf16>
    tpu.vector_store %arg4[%c0_3, %c0_4], %4 {strides = array<i32>} : memref<512x128xbf16, #tpu.memory_space<vmem>>, vector<512x128xbf16>,
    %6 = vector.extract_strided_slice %2 {offsets = [0, 128], sizes = [512, 128], strides = [1, 1]} : vector<512x256xf32> to vector<512x128xf32>
    %c0_5 = arith.constant 0 : index
    %c0_6 = arith.constant 0 : index
    %7 = vector.load %arg3[%c0_5, %c0_6] : memref<1x128xf32, #tpu.memory_space<vmem>>, vector<1x128xf32>
    %8 = vector.broadcast %7 : vector<1x128xf32> to vector<512x128xf32>
    %9 = arith.addf %6, %8 : vector<512x128xf32>
    %c0_7 = arith.constant 0 : index
    %c0_8 = arith.constant 0 : index
    %10 = vector.load %arg5[%c0_7, %c0_8] : memref<512x128xf32, #tpu.memory_space<vmem>>, vector<512x128xf32>
    tpu.vector_store %arg5[%c0_7, %c0_8], %9 {strides = array<i32>} : memref<512x128xf32, #tpu.memory_space<vmem>>, vector<512x128xf32>,
    return
  }
  func.func @transform_0(%arg0: i32) -> (i32, i32) {
    %c0_i32 = arith.constant 0 : i32
    %c0_i32_0 = arith.constant 0 : i32
    return %arg0, %c0_i32 : i32, i32
  }
  func.func @transform_1(%arg0: i32) -> (i32, i32) {
    %c0_i32 = arith.constant 0 : i32
    %c0_i32_0 = arith.constant 0 : i32
    %c0_i32_1 = arith.constant 0 : i32
    return %c0_i32, %c0_i32_0 : i32, i32
  }
  func.func @transform_2(%arg0: i32) -> (i32, i32) {
    %c0_i32 = arith.constant 0 : i32
    %c0_i32_0 = arith.constant 0 : i32
    %c0_i32_1 = arith.constant 0 : i32
    return %c0_i32, %c0_i32_0 : i32, i32
  }
  func.func @transform_3(%arg0: i32) -> (i32, i32) {
    %c0_i32 = arith.constant 0 : i32
    %c0_i32_0 = arith.constant 0 : i32
    return %arg0, %c0_i32 : i32, i32
  }
  func.func @transform_4(%arg0: i32) -> (i32, i32) {
    %c0_i32 = arith.constant 0 : i32
    %c0_i32_0 = arith.constant 0 : i32
    return %arg0, %c0_i32 : i32, i32
  }
}

</mosaic_0001>

<llo_original>
// kernel: tpu_custom_call.1
$region0: #{tpu_custom_call.1}
  #allocation0 [shape = 'u32[]', space=smem, size = 0x4, offset = 0x4, fixed_abs, tag = 'smem constant byte address 0x4 - core index']
  #allocation1 [shape = 'u32[72,128]{1,0:T(1,128)}', space=vmem, size = 0x9000, scoped, tag = 'internal scratch']
  %s0 = inlined_call_operand.vmem [shape: f32[512,8], index: 0, kind: input, shape index: {}]
  %s1 = inlined_call_operand.vmem [shape: f32[8,256], index: 1, kind: input, shape index: {}]
  %s2 = inlined_call_operand.vmem [shape: f32[1,128], index: 2, kind: input, shape index: {}]
  %s3 = inlined_call_operand.hbm [shape: bf16[512,128], index: 3, kind: output, shape index: {0}]
  %s4 = inlined_call_operand.hbm [shape: f32[512,128], index: 4, kind: output, shape index: {1}]
  %5 = xla_tuple %s3, %s4
  %s6 = sld [smem:[#allocation0]]
  $region30: #{tpu_custom_call.1} parent=0
    _
  %s8 = ssub.s32 1, %s6
  %s9 = scalar_select 0, %s8, %s6
  $region1: #{tpu_custom_call.1} parent=0
    #allocation2 [shape = 'u8[131072]{0}', space=vmem, size = 0x20000, scoped, tag = 'output window, operand 0, single buffered']
    #allocation3 [shape = 's32[1]{0}', space=sflag, size = 0x4, scoped, tag = 'scoped memory for tpu_custom_call.1']
    #allocation4 [shape = 'u8[262144]{0}', space=vmem, size = 0x40000, scoped, tag = 'output window, operand 1, single buffered']
    #allocation5 [shape = 's32[1]{0}', space=sflag, size = 0x4, scoped, tag = 'scoped memory for tpu_custom_call.1']
    %10 = vsyncpa [#allocation3], 0
    %11 = vsyncpa [#allocation5], 0
    // Predicated region
    $region2: #{tpu_custom_call.1} parent=1 // pred_check
      _
    $region3: #{tpu_custom_call.1} parent=1 // pred_check_branch
      %13 = sbr.rel (0) target = $region5
    $region4: #{tpu_custom_call.1} parent=1 // pred_region
      _
    $region5: #{tpu_custom_call.1} parent=1 // pred_fallthru
      _
    // Predicated region
    $region6: #{tpu_custom_call.1} parent=1 // pred_check
      _
    $region7: #{tpu_custom_call.1} parent=1 // pred_check_branch
      %15 = sbr.rel (0) target = $region9
    $region8: #{tpu_custom_call.1} parent=1 // pred_region
      _
    $region9: #{tpu_custom_call.1} parent=1 // pred_fallthru
      _
    // Predicated region
    $region10: #{tpu_custom_call.1} parent=1 // pred_check
      _
    $region11: #{tpu_custom_call.1} parent=1 // pred_check_branch
      %17 = sbr.rel (0) target = $region13
    $region12: #{tpu_custom_call.1} parent=1 // pred_region
      _
    $region13: #{tpu_custom_call.1} parent=1 // pred_fallthru
      _
    %v18 = vld [vmem:[%s0] sm:$0xff]
    %v19 = vld [vmem:[%s0 + $0x8] sm:$0xff]
    %v20 = vld [vmem:[%s0 + $0x10] sm:$0xff]
    %v21 = vld [vmem:[%s0 + $0x18] sm:$0xff]
    %v22 = vld [vmem:[%s0 + $0x20] sm:$0xff]
    %v23 = vld [vmem:[%s0 + $0x28] sm:$0xff]
    %v24 = vld [vmem:[%s0 + $0x30] sm:$0xff]
    %v25 = vld [vmem:[%s0 + $0x38] sm:$0xff]
    %v26 = vld [vmem:[%s0 + $0x40] sm:$0xff]
    %v27 = vld [vmem:[%s0 + $0x48] sm:$0xff]
    %v28 = vld [vmem:[%s0 + $0x50] sm:$0xff]
    %v29 = vld [vmem:[%s0 + $0x58] sm:$0xff]
    %v30 = vld [vmem:[%s0 + $0x60] sm:$0xff]
    %v31 = vld [vmem:[%s0 + $0x68] sm:$0xff]
    %v32 = vld [vmem:[%s0 + $0x70] sm:$0xff]
    %v33 = vld [vmem:[%s0 + $0x78] sm:$0xff]
    %v34 = vld [vmem:[%s0 + $0x80] sm:$0xff]
    %v35 = vld [vmem:[%s0 + $0x88] sm:$0xff]
    %v36 = vld [vmem:[%s0 + $0x90] sm:$0xff]
    %v37 = vld [vmem:[%s0 + $0x98] sm:$0xff]
    %v38 = vld [vmem:[%s0 + $0xa0] sm:$0xff]
    %v39 = vld [vmem:[%s0 + $0xa8] sm:$0xff]
    %v40 = vld [vmem:[%s0 + $0xb0] sm:$0xff]
    %v41 = vld [vmem:[%s0 + $0xb8] sm:$0xff]
    %v42 = vld [vmem:[%s0 + $0xc0] sm:$0xff]
    %v43 = vld [vmem:[%s0 + $0xc8] sm:$0xff]
    %v44 = vld [vmem:[%s0 + $0xd0] sm:$0xff]
    %v45 = vld [vmem:[%s0 + $0xd8] sm:$0xff]
    %v46 = vld [vmem:[%s0 + $0xe0] sm:$0xff]
    %v47 = vld [vmem:[%s0 + $0xe8] sm:$0xff]
    %v48 = vld [vmem:[%s0 + $0xf0] sm:$0xff]
    %v49 = vld [vmem:[%s0 + $0xf8] sm:$0xff]
    %v50 = vld [vmem:[%s0 + $0x100] sm:$0xff]
    %v51 = vld [vmem:[%s0 + $0x108] sm:$0xff]
    %v52 = vld [vmem:[%s0 + $0x110] sm:$0xff]
    %v53 = vld [vmem:[%s0 + $0x118] sm:$0xff]
    %v54 = vld [vmem:[%s0 + $0x120] sm:$0xff]
    %v55 = vld [vmem:[%s0 + $0x128] sm:$0xff]
    %v56 = vld [vmem:[%s0 + $0x130] sm:$0xff]
    %v57 = vld [vmem:[%s0 + $0x138] sm:$0xff]
    %v58 = vld [vmem:[%s0 + $0x140] sm:$0xff]
    %v59 = vld [vmem:[%s0 + $0x148] sm:$0xff]
    %v60 = vld [vmem:[%s0 + $0x150] sm:$0xff]
    %v61 = vld [vmem:[%s0 + $0x158] sm:$0xff]
    %v62 = vld [vmem:[%s0 + $0x160] sm:$0xff]
    %v63 = vld [vmem:[%s0 + $0x168] sm:$0xff]
    %v64 = vld [vmem:[%s0 + $0x170] sm:$0xff]
    %v65 = vld [vmem:[%s0 + $0x178] sm:$0xff]
    %v66 = vld [vmem:[%s0 + $0x180] sm:$0xff]
    %v67 = vld [vmem:[%s0 + $0x188] sm:$0xff]
    %v68 = vld [vmem:[%s0 + $0x190] sm:$0xff]
    %v69 = vld [vmem:[%s0 + $0x198] sm:$0xff]
    %v70 = vld [vmem:[%s0 + $0x1a0] sm:$0xff]
    %v71 = vld [vmem:[%s0 + $0x1a8] sm:$0xff]
    %v72 = vld [vmem:[%s0 + $0x1b0] sm:$0xff]
    %v73 = vld [vmem:[%s0 + $0x1b8] sm:$0xff]
    %v74 = vld [vmem:[%s0 + $0x1c0] sm:$0xff]
    %v75 = vld [vmem:[%s0 + $0x1c8] sm:$0xff]
    %v76 = vld [vmem:[%s0 + $0x1d0] sm:$0xff]
    %v77 = vld [vmem:[%s0 + $0x1d8] sm:$0xff]
    %v78 = vld [vmem:[%s0 + $0x1e0] sm:$0xff]
    %v79 = vld [vmem:[%s0 + $0x1e8] sm:$0xff]
    %v80 = vld [vmem:[%s0 + $0x1f0] sm:$0xff]
    %v81 = vld [vmem:[%s0 + $0x1f8] sm:$0xff]
    %v82 = vld [vmem:[%s1] sm:$0xff]
    %v83 = vld [vmem:[%s1 + $0x8] sm:$0xff]
    %vm84 = vcmask 64512
    %v86 = vsel %vm84, %v18, 0
    %v89 = vsel %vm84, %v19, 0
    %v92 = vsel %vm84, %v20, 0
    %v95 = vsel %vm84, %v21, 0
    %v98 = vsel %vm84, %v22, 0
    %v101 = vsel %vm84, %v23, 0
    %v104 = vsel %vm84, %v24, 0
    %v107 = vsel %vm84, %v25, 0
    %v110 = vsel %vm84, %v26, 0
    %v113 = vsel %vm84, %v27, 0
    %v116 = vsel %vm84, %v28, 0
    %v119 = vsel %vm84, %v29, 0
    %v122 = vsel %vm84, %v30, 0
    %v125 = vsel %vm84, %v31, 0
    %v128 = vsel %vm84, %v32, 0
    %v131 = vsel %vm84, %v33, 0
    %v134 = vsel %vm84, %v34, 0
    %v137 = vsel %vm84, %v35, 0
    %v140 = vsel %vm84, %v36, 0
    %v143 = vsel %vm84, %v37, 0
    %v146 = vsel %vm84, %v38, 0
    %v149 = vsel %vm84, %v39, 0
    %v152 = vsel %vm84, %v40, 0
    %v155 = vsel %vm84, %v41, 0
    %v158 = vsel %vm84, %v42, 0
    %v161 = vsel %vm84, %v43, 0
    %v164 = vsel %vm84, %v44, 0
    %v167 = vsel %vm84, %v45, 0
    %v170 = vsel %vm84, %v46, 0
    %v173 = vsel %vm84, %v47, 0
    %v176 = vsel %vm84, %v48, 0
    %v179 = vsel %vm84, %v49, 0
    %v182 = vsel %vm84, %v50, 0
    %v185 = vsel %vm84, %v51, 0
    %v188 = vsel %vm84, %v52, 0
    %v191 = vsel %vm84, %v53, 0
    %v194 = vsel %vm84, %v54, 0
    %v197 = vsel %vm84, %v55, 0
    %v200 = vsel %vm84, %v56, 0
    %v203 = vsel %vm84, %v57, 0
    %v206 = vsel %vm84, %v58, 0
    %v209 = vsel %vm84, %v59, 0
    %v212 = vsel %vm84, %v60, 0
    %v215 = vsel %vm84, %v61, 0
    %v218 = vsel %vm84, %v62, 0
    %v221 = vsel %vm84, %v63, 0
    %v224 = vsel %vm84, %v64, 0
    %v227 = vsel %vm84, %v65, 0
    %v230 = vsel %vm84, %v66, 0
    %v233 = vsel %vm84, %v67, 0
    %v236 = vsel %vm84, %v68, 0
    %v239 = vsel %vm84, %v69, 0
    %v242 = vsel %vm84, %v70, 0
    %v245 = vsel %vm84, %v71, 0
    %v248 = vsel %vm84, %v72, 0
    %v251 = vsel %vm84, %v73, 0
    %v254 = vsel %vm84, %v74, 0
    %v257 = vsel %vm84, %v75, 0
    %v260 = vsel %vm84, %v76, 0
    %v263 = vsel %vm84, %v77, 0
    %v266 = vsel %vm84, %v78, 0
    %v269 = vsel %vm84, %v79, 0
    %v272 = vsel %vm84, %v80, 0
    %v275 = vsel %vm84, %v81, 0
    %277 = vmatpush.msra.mxu0 0.0
    %278 = vmatpush.msra.mxu0 0.0
    %279 = vmatpush.msra.mxu0 0.0
    %280 = vmatpush.msra.mxu0 0.0
    %281 = vmatpush.msra.mxu0 0.0
    %282 = vmatpush.msra.mxu0 0.0
    %283 = vmatpush.msra.mxu0 0.0
    %284 = vmatpush.msra.mxu0 0.0
    %285 = vmatpush.msra.mxu0 0.0
    %286 = vmatpush.msra.mxu0 0.0
    %287 = vmatpush.msra.mxu0 0.0
    %288 = vmatpush.msra.mxu0 0.0
    %289 = vmatpush.msra.mxu0 0.0
    %290 = vmatpush.msra.mxu0 0.0
    %291 = vmatpush.msra.mxu0 0.0
    %292 = vmatpush.msra.mxu0 %v82
    %293 = vmatmul.f32.gmra.mxu0 %v86
    %v294 = vpop.f32.mrf.mxu0
    %v295 = vadd.f32 0.0, %v294
    %296 = vmatmul.f32.gmra.mxu0 %v89
    %v297 = vpop.f32.mrf.mxu0
    %v298 = vadd.f32 0.0, %v297
    %299 = vmatmul.f32.gmra.mxu0 %v92
    %v300 = vpop.f32.mrf.mxu0
    %v301 = vadd.f32 0.0, %v300
    %302 = vmatmul.f32.gmra.mxu0 %v95
    %v303 = vpop.f32.mrf.mxu0
    %v304 = vadd.f32 0.0, %v303
    %305 = vmatmul.f32.gmra.mxu0 %v98
    %v306 = vpop.f32.mrf.mxu0
    %v307 = vadd.f32 0.0, %v306
    %308 = vmatmul.f32.gmra.mxu0 %v101
    %v309 = vpop.f32.mrf.mxu0
    %v310 = vadd.f32 0.0, %v309
    %311 = vmatmul.f32.gmra.mxu0 %v104
    %v312 = vpop.f32.mrf.mxu0
    %v313 = vadd.f32 0.0, %v312
    %314 = vmatmul.f32.gmra.mxu0 %v107
    %v315 = vpop.f32.mrf.mxu0
    %v316 = vadd.f32 0.0, %v315
    %317 = vmatmul.f32.gmra.mxu0 %v110
    %v318 = vpop.f32.mrf.mxu0
    %v319 = vadd.f32 0.0, %v318
    %320 = vmatmul.f32.gmra.mxu0 %v113
    %v321 = vpop.f32.mrf.mxu0
    %v322 = vadd.f32 0.0, %v321
    %323 = vmatmul.f32.gmra.mxu0 %v116
    %v324 = vpop.f32.mrf.mxu0
    %v325 = vadd.f32 0.0, %v324
    %326 = vmatmul.f32.gmra.mxu0 %v119
    %v327 = vpop.f32.mrf.mxu0
    %v328 = vadd.f32 0.0, %v327
    %329 = vmatmul.f32.gmra.mxu0 %v122
    %v330 = vpop.f32.mrf.mxu0
    %v331 = vadd.f32 0.0, %v330
    %332 = vmatmul.f32.gmra.mxu0 %v125
    %v333 = vpop.f32.mrf.mxu0
    %v334 = vadd.f32 0.0, %v333
    %335 = vmatmul.f32.gmra.mxu0 %v128
    %v336 = vpop.f32.mrf.mxu0
    %v337 = vadd.f32 0.0, %v336
    %338 = vmatmul.f32.gmra.mxu0 %v131
    %v339 = vpop.f32.mrf.mxu0
    %v340 = vadd.f32 0.0, %v339
    %341 = vmatmul.f32.gmra.mxu0 %v134
    %v342 = vpop.f32.mrf.mxu0
    %v343 = vadd.f32 0.0, %v342
    %344 = vmatmul.f32.gmra.mxu0 %v137
    %v345 = vpop.f32.mrf.mxu0
    %v346 = vadd.f32 0.0, %v345
    %347 = vmatmul.f32.gmra.mxu0 %v140
    %v348 = vpop.f32.mrf.mxu0
    %v349 = vadd.f32 0.0, %v348
    %350 = vmatmul.f32.gmra.mxu0 %v143
    %v351 = vpop.f32.mrf.mxu0
    %v352 = vadd.f32 0.0, %v351
    %353 = vmatmul.f32.gmra.mxu0 %v146
    %v354 = vpop.f32.mrf.mxu0
    %v355 = vadd.f32 0.0, %v354
    %356 = vmatmul.f32.gmra.mxu0 %v149
    %v357 = vpop.f32.mrf.mxu0
    %v358 = vadd.f32 0.0, %v357
    %359 = vmatmul.f32.gmra.mxu0 %v152
    %v360 = vpop.f32.mrf.mxu0
    %v361 = vadd.f32 0.0, %v360
    %362 = vmatmul.f32.gmra.mxu0 %v155
    %v363 = vpop.f32.mrf.mxu0
    %v364 = vadd.f32 0.0, %v363
    %365 = vmatmul.f32.gmra.mxu0 %v158
    %v366 = vpop.f32.mrf.mxu0
    %v367 = vadd.f32 0.0, %v366
    %368 = vmatmul.f32.gmra.mxu0 %v161
    %v369 = vpop.f32.mrf.mxu0
    %v370 = vadd.f32 0.0, %v369
    %371 = vmatmul.f32.gmra.mxu0 %v164
    %v372 = vpop.f32.mrf.mxu0
    %v373 = vadd.f32 0.0, %v372
    %374 = vmatmul.f32.gmra.mxu0 %v167
    %v375 = vpop.f32.mrf.mxu0
    %v376 = vadd.f32 0.0, %v375
    %377 = vmatmul.f32.gmra.mxu0 %v170
    %v378 = vpop.f32.mrf.mxu0
    %v379 = vadd.f32 0.0, %v378
    %380 = vmatmul.f32.gmra.mxu0 %v173
    %v381 = vpop.f32.mrf.mxu0
    %v382 = vadd.f32 0.0, %v381
    %383 = vmatmul.f32.gmra.mxu0 %v176
    %v384 = vpop.f32.mrf.mxu0
    %v385 = vadd.f32 0.0, %v384
    %386 = vmatmul.f32.gmra.mxu0 %v179
    %v387 = vpop.f32.mrf.mxu0
    %v388 = vadd.f32 0.0, %v387
    %389 = vmatmul.f32.gmra.mxu0 %v182
    %v390 = vpop.f32.mrf.mxu0
    %v391 = vadd.f32 0.0, %v390
    %392 = vmatmul.f32.gmra.mxu0 %v185
    %v393 = vpop.f32.mrf.mxu0
    %v394 = vadd.f32 0.0, %v393
    %395 = vmatmul.f32.gmra.mxu0 %v188
    %v396 = vpop.f32.mrf.mxu0
    %v397 = vadd.f32 0.0, %v396
    %398 = vmatmul.f32.gmra.mxu0 %v191
    %v399 = vpop.f32.mrf.mxu0
    %v400 = vadd.f32 0.0, %v399
    %401 = vmatmul.f32.gmra.mxu0 %v194
    %v402 = vpop.f32.mrf.mxu0
    %v403 = vadd.f32 0.0, %v402
    %404 = vmatmul.f32.gmra.mxu0 %v197
    %v405 = vpop.f32.mrf.mxu0
    %v406 = vadd.f32 0.0, %v405
    %407 = vmatmul.f32.gmra.mxu0 %v200
    %v408 = vpop.f32.mrf.mxu0
    %v409 = vadd.f32 0.0, %v408
    %410 = vmatmul.f32.gmra.mxu0 %v203
    %v411 = vpop.f32.mrf.mxu0
    %v412 = vadd.f32 0.0, %v411
    %413 = vmatmul.f32.gmra.mxu0 %v206
    %v414 = vpop.f32.mrf.mxu0
    %v415 = vadd.f32 0.0, %v414
    %416 = vmatmul.f32.gmra.mxu0 %v209
    %v417 = vpop.f32.mrf.mxu0
    %v418 = vadd.f32 0.0, %v417
    %419 = vmatmul.f32.gmra.mxu0 %v212
    %v420 = vpop.f32.mrf.mxu0
    %v421 = vadd.f32 0.0, %v420
    %422 = vmatmul.f32.gmra.mxu0 %v215
    %v423 = vpop.f32.mrf.mxu0
    %v424 = vadd.f32 0.0, %v423
    %425 = vmatmul.f32.gmra.mxu0 %v218
    %v426 = vpop.f32.mrf.mxu0
    %v427 = vadd.f32 0.0, %v426
    %428 = vmatmul.f32.gmra.mxu0 %v221
    %v429 = vpop.f32.mrf.mxu0
    %v430 = vadd.f32 0.0, %v429
    %431 = vmatmul.f32.gmra.mxu0 %v224
    %v432 = vpop.f32.mrf.mxu0
    %v433 = vadd.f32 0.0, %v432
    %434 = vmatmul.f32.gmra.mxu0 %v227
    %v435 = vpop.f32.mrf.mxu0
    %v436 = vadd.f32 0.0, %v435
    %437 = vmatmul.f32.gmra.mxu0 %v230
    %v438 = vpop.f32.mrf.mxu0
    %v439 = vadd.f32 0.0, %v438
    %440 = vmatmul.f32.gmra.mxu0 %v233
    %v441 = vpop.f32.mrf.mxu0
    %v442 = vadd.f32 0.0, %v441
    %443 = vmatmul.f32.gmra.mxu0 %v236
    %v444 = vpop.f32.mrf.mxu0
    %v445 = vadd.f32 0.0, %v444
    %446 = vmatmul.f32.gmra.mxu0 %v239
    %v447 = vpop.f32.mrf.mxu0
    %v448 = vadd.f32 0.0, %v447
    %449 = vmatmul.f32.gmra.mxu0 %v242
    %v450 = vpop.f32.mrf.mxu0
    %v451 = vadd.f32 0.0, %v450
    %452 = vmatmul.f32.gmra.mxu0 %v245
    %v453 = vpop.f32.mrf.mxu0
    %v454 = vadd.f32 0.0, %v453
    %455 = vmatmul.f32.gmra.mxu0 %v248
    %v456 = vpop.f32.mrf.mxu0
    %v457 = vadd.f32 0.0, %v456
    %458 = vmatmul.f32.gmra.mxu0 %v251
    %v459 = vpop.f32.mrf.mxu0
    %v460 = vadd.f32 0.0, %v459
    %461 = vmatmul.f32.gmra.mxu0 %v254
    %v462 = vpop.f32.mrf.mxu0
    %v463 = vadd.f32 0.0, %v462
    %464 = vmatmul.f32.gmra.mxu0 %v257
    %v465 = vpop.f32.mrf.mxu0
    %v466 = vadd.f32 0.0, %v465
    %467 = vmatmul.f32.gmra.mxu0 %v260
    %v468 = vpop.f32.mrf.mxu0
    %v469 = vadd.f32 0.0, %v468
    %470 = vmatmul.f32.gmra.mxu0 %v263
    %v471 = vpop.f32.mrf.mxu0
    %v472 = vadd.f32 0.0, %v471
    %473 = vmatmul.f32.gmra.mxu0 %v266
    %v474 = vpop.f32.mrf.mxu0
    %v475 = vadd.f32 0.0, %v474
    %476 = vmatmul.f32.gmra.mxu0 %v269
    %v477 = vpop.f32.mrf.mxu0
    %v478 = vadd.f32 0.0, %v477
    %479 = vmatmul.f32.gmra.mxu0 %v272
    %v480 = vpop.f32.mrf.mxu0
    %v481 = vadd.f32 0.0, %v480
    %482 = vmatmul.f32.gmra.mxu0 %v275
    %v483 = vpop.f32.mrf.mxu0
    %v484 = vadd.f32 0.0, %v483
    %485 = vdwg.mxu0
    %486 = vmatpush.msra.mxu0 0.0
    %487 = vmatpush.msra.mxu0 0.0
    %488 = vmatpush.msra.mxu0 0.0
    %489 = vmatpush.msra.mxu0 0.0
    %490 = vmatpush.msra.mxu0 0.0
    %491 = vmatpush.msra.mxu0 0.0
    %492 = vmatpush.msra.mxu0 0.0
    %493 = vmatpush.msra.mxu0 0.0
    %494 = vmatpush.msra.mxu0 0.0
    %495 = vmatpush.msra.mxu0 0.0
    %496 = vmatpush.msra.mxu0 0.0
    %497 = vmatpush.msra.mxu0 0.0
    %498 = vmatpush.msra.mxu0 0.0
    %499 = vmatpush.msra.mxu0 0.0
    %500 = vmatpush.msra.mxu0 0.0
    %501 = vmatpush.msra.mxu0 %v83
    %502 = vmatmul.f32.gmra.mxu0 %v86
    %v503 = vpop.f32.mrf.mxu0
    %v504 = vadd.f32 0.0, %v503
    %505 = vmatmul.f32.gmra.mxu0 %v89
    %v506 = vpop.f32.mrf.mxu0
    %v507 = vadd.f32 0.0, %v506
    %508 = vmatmul.f32.gmra.mxu0 %v92
    %v509 = vpop.f32.mrf.mxu0
    %v510 = vadd.f32 0.0, %v509
    %511 = vmatmul.f32.gmra.mxu0 %v95
    %v512 = vpop.f32.mrf.mxu0
    %v513 = vadd.f32 0.0, %v512
    %514 = vmatmul.f32.gmra.mxu0 %v98
    %v515 = vpop.f32.mrf.mxu0
    %v516 = vadd.f32 0.0, %v515
    %517 = vmatmul.f32.gmra.mxu0 %v101
    %v518 = vpop.f32.mrf.mxu0
    %v519 = vadd.f32 0.0, %v518
    %520 = vmatmul.f32.gmra.mxu0 %v104
    %v521 = vpop.f32.mrf.mxu0
    %v522 = vadd.f32 0.0, %v521
    %523 = vmatmul.f32.gmra.mxu0 %v107
    %v524 = vpop.f32.mrf.mxu0
    %v525 = vadd.f32 0.0, %v524
    %526 = vmatmul.f32.gmra.mxu0 %v110
    %v527 = vpop.f32.mrf.mxu0
    %v528 = vadd.f32 0.0, %v527
    %529 = vmatmul.f32.gmra.mxu0 %v113
    %v530 = vpop.f32.mrf.mxu0
    %v531 = vadd.f32 0.0, %v530
    %532 = vmatmul.f32.gmra.mxu0 %v116
    %v533 = vpop.f32.mrf.mxu0
    %v534 = vadd.f32 0.0, %v533
    %535 = vmatmul.f32.gmra.mxu0 %v119
    %v536 = vpop.f32.mrf.mxu0
    %v537 = vadd.f32 0.0, %v536
    %538 = vmatmul.f32.gmra.mxu0 %v122
    %v539 = vpop.f32.mrf.mxu0
    %v540 = vadd.f32 0.0, %v539
    %541 = vmatmul.f32.gmra.mxu0 %v125
    %v542 = vpop.f32.mrf.mxu0
    %v543 = vadd.f32 0.0, %v542
    %544 = vmatmul.f32.gmra.mxu0 %v128
    %v545 = vpop.f32.mrf.mxu0
    %v546 = vadd.f32 0.0, %v545
    %547 = vmatmul.f32.gmra.mxu0 %v131
    %v548 = vpop.f32.mrf.mxu0
    %v549 = vadd.f32 0.0, %v548
    %550 = vmatmul.f32.gmra.mxu0 %v134
    %v551 = vpop.f32.mrf.mxu0
    %v552 = vadd.f32 0.0, %v551
    %553 = vmatmul.f32.gmra.mxu0 %v137
    %v554 = vpop.f32.mrf.mxu0
    %v555 = vadd.f32 0.0, %v554
    %556 = vmatmul.f32.gmra.mxu0 %v140
    %v557 = vpop.f32.mrf.mxu0
    %v558 = vadd.f32 0.0, %v557
    %559 = vmatmul.f32.gmra.mxu0 %v143
    %v560 = vpop.f32.mrf.mxu0
    %v561 = vadd.f32 0.0, %v560
    %562 = vmatmul.f32.gmra.mxu0 %v146
    %v563 = vpop.f32.mrf.mxu0
    %v564 = vadd.f32 0.0, %v563
    %565 = vmatmul.f32.gmra.mxu0 %v149
    %v566 = vpop.f32.mrf.mxu0
    %v567 = vadd.f32 0.0, %v566
    %568 = vmatmul.f32.gmra.mxu0 %v152
    %v569 = vpop.f32.mrf.mxu0
    %v570 = vadd.f32 0.0, %v569
    %571 = vmatmul.f32.gmra.mxu0 %v155
    %v572 = vpop.f32.mrf.mxu0
    %v573 = vadd.f32 0.0, %v572
    %574 = vmatmul.f32.gmra.mxu0 %v158
    %v575 = vpop.f32.mrf.mxu0
    %v576 = vadd.f32 0.0, %v575
    %577 = vmatmul.f32.gmra.mxu0 %v161
    %v578 = vpop.f32.mrf.mxu0
    %v579 = vadd.f32 0.0, %v578
    %580 = vmatmul.f32.gmra.mxu0 %v164
    %v581 = vpop.f32.mrf.mxu0
    %v582 = vadd.f32 0.0, %v581
    %583 = vmatmul.f32.gmra.mxu0 %v167
    %v584 = vpop.f32.mrf.mxu0
    %v585 = vadd.f32 0.0, %v584
    %586 = vmatmul.f32.gmra.mxu0 %v170
    %v587 = vpop.f32.mrf.mxu0
    %v588 = vadd.f32 0.0, %v587
    %589 = vmatmul.f32.gmra.mxu0 %v173
    %v590 = vpop.f32.mrf.mxu0
    %v591 = vadd.f32 0.0, %v590
    %592 = vmatmul.f32.gmra.mxu0 %v176
    %v593 = vpop.f32.mrf.mxu0
    %v594 = vadd.f32 0.0, %v593
    %595 = vmatmul.f32.gmra.mxu0 %v179
    %v596 = vpop.f32.mrf.mxu0
    %v597 = vadd.f32 0.0, %v596
    %598 = vmatmul.f32.gmra.mxu0 %v182
    %v599 = vpop.f32.mrf.mxu0
    %v600 = vadd.f32 0.0, %v599
    %601 = vmatmul.f32.gmra.mxu0 %v185
    %v602 = vpop.f32.mrf.mxu0
    %v603 = vadd.f32 0.0, %v602
    %604 = vmatmul.f32.gmra.mxu0 %v188
    %v605 = vpop.f32.mrf.mxu0
    %v606 = vadd.f32 0.0, %v605
    %607 = vmatmul.f32.gmra.mxu0 %v191
    %v608 = vpop.f32.mrf.mxu0
    %v609 = vadd.f32 0.0, %v608
    %610 = vmatmul.f32.gmra.mxu0 %v194
    %v611 = vpop.f32.mrf.mxu0
    %v612 = vadd.f32 0.0, %v611
    %613 = vmatmul.f32.gmra.mxu0 %v197
    %v614 = vpop.f32.mrf.mxu0
    %v615 = vadd.f32 0.0, %v614
    %616 = vmatmul.f32.gmra.mxu0 %v200
    %v617 = vpop.f32.mrf.mxu0
    %v618 = vadd.f32 0.0, %v617
    %619 = vmatmul.f32.gmra.mxu0 %v203
    %v620 = vpop.f32.mrf.mxu0
    %v621 = vadd.f32 0.0, %v620
    %622 = vmatmul.f32.gmra.mxu0 %v206
    %v623 = vpop.f32.mrf.mxu0
    %v624 = vadd.f32 0.0, %v623
    %625 = vmatmul.f32.gmra.mxu0 %v209
    %v626 = vpop.f32.mrf.mxu0
    %v627 = vadd.f32 0.0, %v626
    %628 = vmatmul.f32.gmra.mxu0 %v212
    %v629 = vpop.f32.mrf.mxu0
    %v630 = vadd.f32 0.0, %v629
    %631 = vmatmul.f32.gmra.mxu0 %v215
    %v632 = vpop.f32.mrf.mxu0
    %v633 = vadd.f32 0.0, %v632
    %634 = vmatmul.f32.gmra.mxu0 %v218
    %v635 = vpop.f32.mrf.mxu0
    %v636 = vadd.f32 0.0, %v635
    %637 = vmatmul.f32.gmra.mxu0 %v221
    %v638 = vpop.f32.mrf.mxu0
    %v639 = vadd.f32 0.0, %v638
    %640 = vmatmul.f32.gmra.mxu0 %v224
    %v641 = vpop.f32.mrf.mxu0
    %v642 = vadd.f32 0.0, %v641
    %643 = vmatmul.f32.gmra.mxu0 %v227
    %v644 = vpop.f32.mrf.mxu0
    %v645 = vadd.f32 0.0, %v644
    %646 = vmatmul.f32.gmra.mxu0 %v230
    %v647 = vpop.f32.mrf.mxu0
    %v648 = vadd.f32 0.0, %v647
    %649 = vmatmul.f32.gmra.mxu0 %v233
    %v650 = vpop.f32.mrf.mxu0
    %v651 = vadd.f32 0.0, %v650
    %652 = vmatmul.f32.gmra.mxu0 %v236
    %v653 = vpop.f32.mrf.mxu0
    %v654 = vadd.f32 0.0, %v653
    %655 = vmatmul.f32.gmra.mxu0 %v239
    %v656 = vpop.f32.mrf.mxu0
    %v657 = vadd.f32 0.0, %v656
    %658 = vmatmul.f32.gmra.mxu0 %v242
    %v659 = vpop.f32.mrf.mxu0
    %v660 = vadd.f32 0.0, %v659
    %661 = vmatmul.f32.gmra.mxu0 %v245
    %v662 = vpop.f32.mrf.mxu0
    %v663 = vadd.f32 0.0, %v662
    %664 = vmatmul.f32.gmra.mxu0 %v248
    %v665 = vpop.f32.mrf.mxu0
    %v666 = vadd.f32 0.0, %v665
    %667 = vmatmul.f32.gmra.mxu0 %v251
    %v668 = vpop.f32.mrf.mxu0
    %v669 = vadd.f32 0.0, %v668
    %670 = vmatmul.f32.gmra.mxu0 %v254
    %v671 = vpop.f32.mrf.mxu0
    %v672 = vadd.f32 0.0, %v671
    %673 = vmatmul.f32.gmra.mxu0 %v257
    %v674 = vpop.f32.mrf.mxu0
    %v675 = vadd.f32 0.0, %v674
    %676 = vmatmul.f32.gmra.mxu0 %v260
    %v677 = vpop.f32.mrf.mxu0
    %v678 = vadd.f32 0.0, %v677
    %679 = vmatmul.f32.gmra.mxu0 %v263
    %v680 = vpop.f32.mrf.mxu0
    %v681 = vadd.f32 0.0, %v680
    %682 = vmatmul.f32.gmra.mxu0 %v266
    %v683 = vpop.f32.mrf.mxu0
    %v684 = vadd.f32 0.0, %v683
    %685 = vmatmul.f32.gmra.mxu0 %v269
    %v686 = vpop.f32.mrf.mxu0
    %v687 = vadd.f32 0.0, %v686
    %688 = vmatmul.f32.gmra.mxu0 %v272
    %v689 = vpop.f32.mrf.mxu0
    %v690 = vadd.f32 0.0, %v689
    %691 = vmatmul.f32.gmra.mxu0 %v275
    %v692 = vpop.f32.mrf.mxu0
    %v693 = vadd.f32 0.0, %v692
    %694 = vdwg.mxu0
    %v695 = vpack.c.bf16 %v295, %v295
    %v696 = vpack.c.bf16 %v298, %v298
    %v697 = vpack.c.bf16 %v301, %v301
    %v698 = vpack.c.bf16 %v304, %v304
    %v699 = vpack.c.bf16 %v307, %v307
    %v700 = vpack.c.bf16 %v310, %v310
    %v701 = vpack.c.bf16 %v313, %v313
    %v702 = vpack.c.bf16 %v316, %v316
    %v703 = vpack.c.bf16 %v319, %v319
    %v704 = vpack.c.bf16 %v322, %v322
    %v705 = vpack.c.bf16 %v325, %v325
    %v706 = vpack.c.bf16 %v328, %v328
    %v707 = vpack.c.bf16 %v331, %v331
    %v708 = vpack.c.bf16 %v334, %v334
    %v709 = vpack.c.bf16 %v337, %v337
    %v710 = vpack.c.bf16 %v340, %v340
    %v711 = vpack.c.bf16 %v343, %v343
    %v712 = vpack.c.bf16 %v346, %v346
    %v713 = vpack.c.bf16 %v349, %v349
    %v714 = vpack.c.bf16 %v352, %v352
    %v715 = vpack.c.bf16 %v355, %v355
    %v716 = vpack.c.bf16 %v358, %v358
    %v717 = vpack.c.bf16 %v361, %v361
    %v718 = vpack.c.bf16 %v364, %v364
    %v719 = vpack.c.bf16 %v367, %v367
    %v720 = vpack.c.bf16 %v370, %v370
    %v721 = vpack.c.bf16 %v373, %v373
    %v722 = vpack.c.bf16 %v376, %v376
    %v723 = vpack.c.bf16 %v379, %v379
    %v724 = vpack.c.bf16 %v382, %v382
    %v725 = vpack.c.bf16 %v385, %v385
    %v726 = vpack.c.bf16 %v388, %v388
    %v727 = vpack.c.bf16 %v391, %v391
    %v728 = vpack.c.bf16 %v394, %v394
    %v729 = vpack.c.bf16 %v397, %v397
    %v730 = vpack.c.bf16 %v400, %v400
    %v731 = vpack.c.bf16 %v403, %v403
    %v732 = vpack.c.bf16 %v406, %v406
    %v733 = vpack.c.bf16 %v409, %v409
    %v734 = vpack.c.bf16 %v412, %v412
    %v735 = vpack.c.bf16 %v415, %v415
    %v736 = vpack.c.bf16 %v418, %v418
    %v737 = vpack.c.bf16 %v421, %v421
    %v738 = vpack.c.bf16 %v424, %v424
    %v739 = vpack.c.bf16 %v427, %v427
    %v740 = vpack.c.bf16 %v430, %v430
    %v741 = vpack.c.bf16 %v433, %v433
    %v742 = vpack.c.bf16 %v436, %v436
    %v743 = vpack.c.bf16 %v439, %v439
    %v744 = vpack.c.bf16 %v442, %v442
    %v745 = vpack.c.bf16 %v445, %v445
    %v746 = vpack.c.bf16 %v448, %v448
    %v747 = vpack.c.bf16 %v451, %v451
    %v748 = vpack.c.bf16 %v454, %v454
    %v749 = vpack.c.bf16 %v457, %v457
    %v750 = vpack.c.bf16 %v460, %v460
    %v751 = vpack.c.bf16 %v463, %v463
    %v752 = vpack.c.bf16 %v466, %v466
    %v753 = vpack.c.bf16 %v469, %v469
    %v754 = vpack.c.bf16 %v472, %v472
    %v755 = vpack.c.bf16 %v475, %v475
    %v756 = vpack.c.bf16 %v478, %v478
    %v757 = vpack.c.bf16 %v481, %v481
    %v758 = vpack.c.bf16 %v484, %v484
    %759 = vst [vmem:[#allocation2] sm:$0xf] %v695
    %760 = vst [vmem:[#allocation2 + $0x4] sm:$0xf] %v696
    %761 = vst [vmem:[#allocation2 + $0x8] sm:$0xf] %v697
    %762 = vst [vmem:[#allocation2 + $0xc] sm:$0xf] %v698
    %763 = vst [vmem:[#allocation2 + $0x10] sm:$0xf] %v699
    %764 = vst [vmem:[#allocation2 + $0x14] sm:$0xf] %v700
    %765 = vst [vmem:[#allocation2 + $0x18] sm:$0xf] %v701
    %766 = vst [vmem:[#allocation2 + $0x1c] sm:$0xf] %v702
    %767 = vst [vmem:[#allocation2 + $0x20] sm:$0xf] %v703
    %768 = vst [vmem:[#allocation2 + $0x24] sm:$0xf] %v704
    %769 = vst [vmem:[#allocation2 + $0x28] sm:$0xf] %v705
    %770 = vst [vmem:[#allocation2 + $0x2c] sm:$0xf] %v706
    %771 = vst [vmem:[#allocation2 + $0x30] sm:$0xf] %v707
    %772 = vst [vmem:[#allocation2 + $0x34] sm:$0xf] %v708
    %773 = vst [vmem:[#allocation2 + $0x38] sm:$0xf] %v709
    %774 = vst [vmem:[#allocation2 + $0x3c] sm:$0xf] %v710
    %775 = vst [vmem:[#allocation2 + $0x40] sm:$0xf] %v711
    %776 = vst [vmem:[#allocation2 + $0x44] sm:$0xf] %v712
    %777 = vst [vmem:[#allocation2 + $0x48] sm:$0xf] %v713
    %778 = vst [vmem:[#allocation2 + $0x4c] sm:$0xf] %v714
    %779 = vst [vmem:[#allocation2 + $0x50] sm:$0xf] %v715
    %780 = vst [vmem:[#allocation2 + $0x54] sm:$0xf] %v716
    %781 = vst [vmem:[#allocation2 + $0x58] sm:$0xf] %v717
    %782 = vst [vmem:[#allocation2 + $0x5c] sm:$0xf] %v718
    %783 = vst [vmem:[#allocation2 + $0x60] sm:$0xf] %v719
    %784 = vst [vmem:[#allocation2 + $0x64] sm:$0xf] %v720
    %785 = vst [vmem:[#allocation2 + $0x68] sm:$0xf] %v721
    %786 = vst [vmem:[#allocation2 + $0x6c] sm:$0xf] %v722
    %787 = vst [vmem:[#allocation2 + $0x70] sm:$0xf] %v723
    %788 = vst [vmem:[#allocation2 + $0x74] sm:$0xf] %v724
    %789 = vst [vmem:[#allocation2 + $0x78] sm:$0xf] %v725
    %790 = vst [vmem:[#allocation2 + $0x7c] sm:$0xf] %v726
    %791 = vst [vmem:[#allocation2 + $0x80] sm:$0xf] %v727
    %792 = vst [vmem:[#allocation2 + $0x84] sm:$0xf] %v728
    %793 = vst [vmem:[#allocation2 + $0x88] sm:$0xf] %v729
    %794 = vst [vmem:[#allocation2 + $0x8c] sm:$0xf] %v730
    %795 = vst [vmem:[#allocation2 + $0x90] sm:$0xf] %v731
    %796 = vst [vmem:[#allocation2 + $0x94] sm:$0xf] %v732
    %797 = vst [vmem:[#allocation2 + $0x98] sm:$0xf] %v733
    %798 = vst [vmem:[#allocation2 + $0x9c] sm:$0xf] %v734
    %799 = vst [vmem:[#allocation2 + $0xa0] sm:$0xf] %v735
    %800 = vst [vmem:[#allocation2 + $0xa4] sm:$0xf] %v736
    %801 = vst [vmem:[#allocation2 + $0xa8] sm:$0xf] %v737
    %802 = vst [vmem:[#allocation2 + $0xac] sm:$0xf] %v738
    %803 = vst [vmem:[#allocation2 + $0xb0] sm:$0xf] %v739
    %804 = vst [vmem:[#allocation2 + $0xb4] sm:$0xf] %v740
    %805 = vst [vmem:[#allocation2 + $0xb8] sm:$0xf] %v741
    %806 = vst [vmem:[#allocation2 + $0xbc] sm:$0xf] %v742
    %807 = vst [vmem:[#allocation2 + $0xc0] sm:$0xf] %v743
    %808 = vst [vmem:[#allocation2 + $0xc4] sm:$0xf] %v744
    %809 = vst [vmem:[#allocation2 + $0xc8] sm:$0xf] %v745
    %810 = vst [vmem:[#allocation2 + $0xcc] sm:$0xf] %v746
    %811 = vst [vmem:[#allocation2 + $0xd0] sm:$0xf] %v747
    %812 = vst [vmem:[#allocation2 + $0xd4] sm:$0xf] %v748
    %813 = vst [vmem:[#allocation2 + $0xd8] sm:$0xf] %v749
    %814 = vst [vmem:[#allocation2 + $0xdc] sm:$0xf] %v750
    %815 = vst [vmem:[#allocation2 + $0xe0] sm:$0xf] %v751
    %816 = vst [vmem:[#allocation2 + $0xe4] sm:$0xf] %v752
    %817 = vst [vmem:[#allocation2 + $0xe8] sm:$0xf] %v753
    %818 = vst [vmem:[#allocation2 + $0xec] sm:$0xf] %v754
    %819 = vst [vmem:[#allocation2 + $0xf0] sm:$0xf] %v755
    %820 = vst [vmem:[#allocation2 + $0xf4] sm:$0xf] %v756
    %821 = vst [vmem:[#allocation2 + $0xf8] sm:$0xf] %v757
    %822 = vst [vmem:[#allocation2 + $0xfc] sm:$0xf] %v758
    %v823 = vld [vmem:[%s2] sm:$0x1]
    %v825 = vperm.slane %v823, 0
    %v827 = vadd.f32 %v504, %v825
    %v828 = vadd.f32 %v507, %v825
    %v829 = vadd.f32 %v510, %v825
    %v830 = vadd.f32 %v513, %v825
    %v831 = vadd.f32 %v516, %v825
    %v832 = vadd.f32 %v519, %v825
    %v833 = vadd.f32 %v522, %v825
    %v834 = vadd.f32 %v525, %v825
    %v835 = vadd.f32 %v528, %v825
    %v836 = vadd.f32 %v531, %v825
    %v837 = vadd.f32 %v534, %v825
    %v838 = vadd.f32 %v537, %v825
    %v839 = vadd.f32 %v540, %v825
    %v840 = vadd.f32 %v543, %v825
    %v841 = vadd.f32 %v546, %v825
    %v842 = vadd.f32 %v549, %v825
    %v843 = vadd.f32 %v552, %v825
    %v844 = vadd.f32 %v555, %v825
    %v845 = vadd.f32 %v558, %v825
    %v846 = vadd.f32 %v561, %v825
    %v847 = vadd.f32 %v564, %v825
    %v848 = vadd.f32 %v567, %v825
    %v849 = vadd.f32 %v570, %v825
    %v850 = vadd.f32 %v573, %v825
    %v851 = vadd.f32 %v576, %v825
    %v852 = vadd.f32 %v579, %v825
    %v853 = vadd.f32 %v582, %v825
    %v854 = vadd.f32 %v585, %v825
    %v855 = vadd.f32 %v588, %v825
    %v856 = vadd.f32 %v591, %v825
    %v857 = vadd.f32 %v594, %v825
    %v858 = vadd.f32 %v597, %v825
    %v859 = vadd.f32 %v600, %v825
    %v860 = vadd.f32 %v603, %v825
    %v861 = vadd.f32 %v606, %v825
    %v862 = vadd.f32 %v609, %v825
    %v863 = vadd.f32 %v612, %v825
    %v864 = vadd.f32 %v615, %v825
    %v865 = vadd.f32 %v618, %v825
    %v866 = vadd.f32 %v621, %v825
    %v867 = vadd.f32 %v624, %v825
    %v868 = vadd.f32 %v627, %v825
    %v869 = vadd.f32 %v630, %v825
    %v870 = vadd.f32 %v633, %v825
    %v871 = vadd.f32 %v636, %v825
    %v872 = vadd.f32 %v639, %v825
    %v873 = vadd.f32 %v642, %v825
    %v874 = vadd.f32 %v645, %v825
    %v875 = vadd.f32 %v648, %v825
    %v876 = vadd.f32 %v651, %v825
    %v877 = vadd.f32 %v654, %v825
    %v878 = vadd.f32 %v657, %v825
    %v879 = vadd.f32 %v660, %v825
    %v880 = vadd.f32 %v663, %v825
    %v881 = vadd.f32 %v666, %v825
    %v882 = vadd.f32 %v669, %v825
    %v883 = vadd.f32 %v672, %v825
    %v884 = vadd.f32 %v675, %v825
    %v885 = vadd.f32 %v678, %v825
    %v886 = vadd.f32 %v681, %v825
    %v887 = vadd.f32 %v684, %v825
    %v888 = vadd.f32 %v687, %v825
    %v889 = vadd.f32 %v690, %v825
    %v890 = vadd.f32 %v693, %v825
    %891 = vst [vmem:[#allocation4] sm:$0xff] %v827
    %892 = vst [vmem:[#allocation4 + $0x8] sm:$0xff] %v828
    %893 = vst [vmem:[#allocation4 + $0x10] sm:$0xff] %v829
    %894 = vst [vmem:[#allocation4 + $0x18] sm:$0xff] %v830
    %895 = vst [vmem:[#allocation4 + $0x20] sm:$0xff] %v831
    %896 = vst [vmem:[#allocation4 + $0x28] sm:$0xff] %v832
    %897 = vst [vmem:[#allocation4 + $0x30] sm:$0xff] %v833
    %898 = vst [vmem:[#allocation4 + $0x38] sm:$0xff] %v834
    %899 = vst [vmem:[#allocation4 + $0x40] sm:$0xff] %v835
    %900 = vst [vmem:[#allocation4 + $0x48] sm:$0xff] %v836
    %901 = vst [vmem:[#allocation4 + $0x50] sm:$0xff] %v837
    %902 = vst [vmem:[#allocation4 + $0x58] sm:$0xff] %v838
    %903 = vst [vmem:[#allocation4 + $0x60] sm:$0xff] %v839
    %904 = vst [vmem:[#allocation4 + $0x68] sm:$0xff] %v840
    %905 = vst [vmem:[#allocation4 + $0x70] sm:$0xff] %v841
    %906 = vst [vmem:[#allocation4 + $0x78] sm:$0xff] %v842
    %907 = vst [vmem:[#allocation4 + $0x80] sm:$0xff] %v843
    %908 = vst [vmem:[#allocation4 + $0x88] sm:$0xff] %v844
    %909 = vst [vmem:[#allocation4 + $0x90] sm:$0xff] %v845
    %910 = vst [vmem:[#allocation4 + $0x98] sm:$0xff] %v846
    %911 = vst [vmem:[#allocation4 + $0xa0] sm:$0xff] %v847
    %912 = vst [vmem:[#allocation4 + $0xa8] sm:$0xff] %v848
    %913 = vst [vmem:[#allocation4 + $0xb0] sm:$0xff] %v849
    %914 = vst [vmem:[#allocation4 + $0xb8] sm:$0xff] %v850
    %915 = vst [vmem:[#allocation4 + $0xc0] sm:$0xff] %v851
    %916 = vst [vmem:[#allocation4 + $0xc8] sm:$0xff] %v852
    %917 = vst [vmem:[#allocation4 + $0xd0] sm:$0xff] %v853
    %918 = vst [vmem:[#allocation4 + $0xd8] sm:$0xff] %v854
    %919 = vst [vmem:[#allocation4 + $0xe0] sm:$0xff] %v855
    %920 = vst [vmem:[#allocation4 + $0xe8] sm:$0xff] %v856
    %921 = vst [vmem:[#allocation4 + $0xf0] sm:$0xff] %v857
    %922 = vst [vmem:[#allocation4 + $0xf8] sm:$0xff] %v858
    %923 = vst [vmem:[#allocation4 + $0x100] sm:$0xff] %v859
    %924 = vst [vmem:[#allocation4 + $0x108] sm:$0xff] %v860
    %925 = vst [vmem:[#allocation4 + $0x110] sm:$0xff] %v861
    %926 = vst [vmem:[#allocation4 + $0x118] sm:$0xff] %v862
    %927 = vst [vmem:[#allocation4 + $0x120] sm:$0xff] %v863
    %928 = vst [vmem:[#allocation4 + $0x128] sm:$0xff] %v864
    %929 = vst [vmem:[#allocation4 + $0x130] sm:$0xff] %v865
    %930 = vst [vmem:[#allocation4 + $0x138] sm:$0xff] %v866
    %931 = vst [vmem:[#allocation4 + $0x140] sm:$0xff] %v867
    %932 = vst [vmem:[#allocation4 + $0x148] sm:$0xff] %v868
    %933 = vst [vmem:[#allocation4 + $0x150] sm:$0xff] %v869
    %934 = vst [vmem:[#allocation4 + $0x158] sm:$0xff] %v870
    %935 = vst [vmem:[#allocation4 + $0x160] sm:$0xff] %v871
    %936 = vst [vmem:[#allocation4 + $0x168] sm:$0xff] %v872
    %937 = vst [vmem:[#allocation4 + $0x170] sm:$0xff] %v873
    %938 = vst [vmem:[#allocation4 + $0x178] sm:$0xff] %v874
    %939 = vst [vmem:[#allocation4 + $0x180] sm:$0xff] %v875
    %940 = vst [vmem:[#allocation4 + $0x188] sm:$0xff] %v876
    %941 = vst [vmem:[#allocation4 + $0x190] sm:$0xff] %v877
    %942 = vst [vmem:[#allocation4 + $0x198] sm:$0xff] %v878
    %943 = vst [vmem:[#allocation4 + $0x1a0] sm:$0xff] %v879
    %944 = vst [vmem:[#allocation4 + $0x1a8] sm:$0xff] %v880
    %945 = vst [vmem:[#allocation4 + $0x1b0] sm:$0xff] %v881
    %946 = vst [vmem:[#allocation4 + $0x1b8] sm:$0xff] %v882
    %947 = vst [vmem:[#allocation4 + $0x1c0] sm:$0xff] %v883
    %948 = vst [vmem:[#allocation4 + $0x1c8] sm:$0xff] %v884
    %949 = vst [vmem:[#allocation4 + $0x1d0] sm:$0xff] %v885
    %950 = vst [vmem:[#allocation4 + $0x1d8] sm:$0xff] %v886
    %951 = vst [vmem:[#allocation4 + $0x1e0] sm:$0xff] %v887
    %952 = vst [vmem:[#allocation4 + $0x1e8] sm:$0xff] %v888
    %953 = vst [vmem:[#allocation4 + $0x1f0] sm:$0xff] %v889
    %954 = vst [vmem:[#allocation4 + $0x1f8] sm:$0xff] %v890
    // Predicated region
    $region14: #{tpu_custom_call.1} parent=1 // pred_check
      _
    $region15: #{tpu_custom_call.1} parent=1 // pred_check_branch
      %956 = sbr.rel (0) target = $region17
    $region16: #{tpu_custom_call.1} parent=1 // pred_region
      %958 = vsyncadd [#allocation3], 0
      %s959 = sshll.u32 [#allocation2], 4
      %s960 = int_to_ptr.vmem [resolvable:$true] %s959
      %s961 = sshll.u32 %s3, 4
      %s962 = int_to_ptr.hbm [resolvable:$true] %s961
      %967 = dma.vmem_to_hbm [thread:$0]  %s960, 4096, %s962, [#allocation3], 64, 64, 4
    $region17: #{tpu_custom_call.1} parent=1 // pred_fallthru
      _
    // Predicated region
    $region18: #{tpu_custom_call.1} parent=1 // pred_check
      _
    $region19: #{tpu_custom_call.1} parent=1 // pred_check_branch
      %969 = sbr.rel (0) target = $region21
    $region20: #{tpu_custom_call.1} parent=1 // pred_region
      %971 = vsyncadd [#allocation5], 0
      %s972 = sshll.u32 [#allocation4], 4
      %s973 = int_to_ptr.vmem [resolvable:$true] %s972
      %s974 = sshll.u32 %s4, 4
      %s975 = int_to_ptr.hbm [resolvable:$true] %s974
      %980 = dma.vmem_to_hbm [thread:$0]  %s973, 8192, %s975, [#allocation5], 128, 128, 8
    $region21: #{tpu_custom_call.1} parent=1 // pred_fallthru
      _
    // Predicated region
    $region22: #{tpu_custom_call.1} parent=1 // pred_check
      _
    $region23: #{tpu_custom_call.1} parent=1 // pred_check_branch
      %982 = sbr.rel (0) target = $region25
    $region24: #{tpu_custom_call.1} parent=1 // pred_region
      %984 = dma.done [#allocation3], 4096
    $region25: #{tpu_custom_call.1} parent=1 // pred_fallthru
      _
    // Predicated region
    $region26: #{tpu_custom_call.1} parent=1 // pred_check
      _
    $region27: #{tpu_custom_call.1} parent=1 // pred_check_branch
      %986 = sbr.rel (0) target = $region29
    $region28: #{tpu_custom_call.1} parent=1 // pred_region
      %988 = dma.done [#allocation5], 8192
    $region29: #{tpu_custom_call.1} parent=1 // pred_fallthru
      _
    %989 = vsyncpa [#allocation3], 1
    %990 = vsyncpa [#allocation5], 1

</llo_original>
